<compile_context>
chip_gen: v7x
topology: tpu7x:2x2x1
jax: 0.10.0
libtpu: 0.0.40
codegen_flags: <defaults>
</compile_context>

<pallas_src>
import functools

import jax
import jax.numpy as jnp
from jax.experimental import pallas as pl
from jax.experimental.pallas import tpu as pltpu


_LANE = 128      # lane width: class axis of W / logits padded to this
_ROW_ALIGN = 16  # batch-row alignment (covers f32 (8,128) and bf16 (16,128))


def _round_up(x, m):
    return (x + m - 1) // m * m


def _choose_tiling(Bx, Bu, cap):
    """Return (tile_m, num_tiles, needs_row_pad).

    Prefer a tile that divides the (equal) batches exactly -> no wrapper-side
    row-pad copy of the dominant X/U HBM streams, and >= 2 tiles so the
    parallel grid axis can be split across both v7x TensorCores.
    """
    cap = max(_ROW_ALIGN, (cap // _ROW_ALIGN) * _ROW_ALIGN)
    if Bx == Bu and Bx % _ROW_ALIGN == 0:
        divs = [t for t in range(_ROW_ALIGN, min(cap, Bx) + 1, _ROW_ALIGN)
                if Bx % t == 0]
        if divs:
            multi = [t for t in divs if Bx // t >= 2]
            tm = max(multi) if multi else max(divs)
            return tm, Bx // tm, False
    # Ragged fallback: unequal or misaligned batches -> row-pad to a full grid.
    n = max(Bx, Bu)
    tm = min(cap, _round_up(n, _ROW_ALIGN))
    return tm, (n + tm - 1) // tm, True


def _pick_tk(D, cap):
    """Feature (reduction) tile: a lane-aligned divisor of D, else full D."""
    if D <= cap:
        return D
    for tk in range(cap, _LANE - 1, -_LANE):
        if D % tk == 0:
            return tk
    return D  # a block whose last dim equals the full array dim is always legal


def _mixmatch_kernel(x_ref, u_ref, p_ref, q_ref, w_ref, b_ref, out_ref,
                     acc_l_ref, acc_u_ref, *, n_classes):
    k = pl.program_id(1)

    @pl.when(k == 0)
    def _init():
        acc_l_ref[...] = jnp.zeros_like(acc_l_ref)
        acc_u_ref[...] = jnp.zeros_like(acc_u_ref)

    # One resident RHS tile of W feeds both MXU dots; f32 accumulation.
    w = w_ref[...]
    acc_l_ref[...] += jnp.dot(x_ref[...], w, preferred_element_type=jnp.float32)
    acc_u_ref[...] += jnp.dot(u_ref[...], w, preferred_element_type=jnp.float32)

    @pl.when(k == pl.num_programs(1) - 1)
    def _finalize():
        C = n_classes
        bias = b_ref[...]                       # (1, Cp): b on [:C], -1e9 after

        # ---- supervised: sum(-p * log_softmax(X@W + b)) over true classes ----
        logits_l = acc_l_ref[...] + bias        # padded lanes ~ -1e9 -> exp == 0
        m = jnp.max(logits_l, axis=1, keepdims=True)
        z = logits_l - m
        lse = jnp.log(jnp.sum(jnp.exp(z), axis=1, keepdims=True))
        log_probs = z - lse                     # finite everywhere
        sup_part = jnp.sum(-p_ref[...].astype(jnp.float32) * log_probs[:, :C])

        # ---- unsupervised: sum((U@W + b - q)^2) over the true C classes ------
        logits_u = acc_u_ref[...][:, :C] + bias[:, :C]
        diff = logits_u - q_ref[...].astype(jnp.float32)
        mse_part = jnp.sum(diff * diff)

        # Merged lane-dense (1, 8, 128) partial-sum slab -> one output DMA:
        #   sublane 0 = supervised partial sum, sublane 1 = MSE partial sum.
        sub = jax.lax.broadcasted_iota(jnp.int32, out_ref.shape, 1)
        out_ref[...] = jnp.where(sub == 0, sup_part,
                                 jnp.where(sub == 1, mse_part, 0.0))


def mixmatch_loss(X, U, p, q, W, b, *, lambda_u=75.0, tile_m=512, tile_k=2048):
    """Pallas implementation of MixMatchLoss.forward with a linear model."""
    Bx, D = X.shape
    Bu, Du = U.shape
    C = p.shape[1]
    assert Du == D and p.shape == (Bx, C) and q.shape == (Bu, C)
    assert W.shape == (D, C) and b.shape == (C,)

    Cp = _round_up(C, _LANE)
    tm, T, needs_pad = _choose_tiling(Bx, Bu, tile_m)
    Npad = T * tm
    tk = _pick_tk(D, tile_k)
    KT = D // tk

    if needs_pad:
        def pad_rows(a):
            pr = Npad - a.shape[0]
            return jnp.pad(a, ((0, pr), (0, 0))) if pr else a
        Xk, Uk, pk, qk = pad_rows(X), pad_rows(U), pad_rows(p), pad_rows(q)
    else:
        Xk, Uk, pk, qk = X, U, p, q   # no HBM copies of the dominant streams

    # W's class axis is padded to a full lane width with zero columns (MXU /
    # lane friendly).  The matching bias carries -1e9 on the padded lanes so
    # the log-softmax ignores them; the MSE path only reads the first C lanes.
    Wp = jnp.pad(W, ((0, 0), (0, Cp - C))) if Cp != C else W
    bf = b.astype(jnp.float32)
    b_sup = jnp.full((1, Cp), -1e9, dtype=jnp.float32).at[0, :C].set(bf)

    kernel = functools.partial(_mixmatch_kernel, n_classes=C)

    # VMEM budget: double-buffered pipelined blocks + f32 accumulators, with a
    # 2x margin for compiler-internal scratch; never the full VMEM of a core.
    dbl = 2
    vmem_need = (dbl * tm * tk * (Xk.dtype.itemsize + Uk.dtype.itemsize)
                 + dbl * tm * C * (pk.dtype.itemsize + qk.dtype.itemsize)
                 + dbl * tk * Cp * Wp.dtype.itemsize
                 + dbl * Cp * 4
                 + dbl * 8 * _LANE * 4
                 + 2 * tm * Cp * 4)
    vmem_limit = int(min(max(2 * vmem_need, 8 << 20), 48 << 20))

    w_stream = Wp.size * Wp.dtype.itemsize * (T if KT > 1 else 1)
    cost = pl.CostEstimate(
        flops=2 * 2 * Npad * D * Cp,
        transcendentals=Npad * (Cp + 1),          # exp per class + log per row
        bytes_accessed=(Xk.size * Xk.dtype.itemsize + Uk.size * Uk.dtype.itemsize
                        + pk.size * pk.dtype.itemsize + qk.size * qk.dtype.itemsize
                        + w_stream + Cp * 4 + T * 8 * _LANE * 4),
    )

    grid_spec = pltpu.PrefetchScalarGridSpec(
        num_scalar_prefetch=0,
        grid=(T, KT),
        in_specs=[
            pl.BlockSpec((tm, tk), lambda i, k: (i, k)),   # X tile
            pl.BlockSpec((tm, tk), lambda i, k: (i, k)),   # U tile
            pl.BlockSpec((tm, C), lambda i, k: (i, 0)),    # p (true class width)
            pl.BlockSpec((tm, C), lambda i, k: (i, 0)),    # q (true class width)
            pl.BlockSpec((tk, Cp), lambda i, k: (k, 0)),   # W tile
            pl.BlockSpec((1, Cp), lambda i, k: (0, 0)),    # bias (invariant)
        ],
        out_specs=pl.BlockSpec((1, 8, _LANE), lambda i, k: (i, 0, 0)),
        scratch_shapes=[pltpu.VMEM((tm, Cp), jnp.float32),   # labeled logits acc
                        pltpu.VMEM((tm, Cp), jnp.float32)],  # unlabeled logits acc
    )

    parts = pl.pallas_call(
        kernel,
        out_shape=jax.ShapeDtypeStruct((T, 8, _LANE), jnp.float32),
        grid_spec=grid_spec,
        compiler_params=pltpu.CompilerParams(
            dimension_semantics=("parallel", "arbitrary"),
            vmem_limit_bytes=vmem_limit),
        cost_estimate=cost,
    )(Xk, Uk, pk, qk, Wp, b_sup)

    sup_sum = jnp.sum(parts[:, 0, 0])
    mse_sum = jnp.sum(parts[:, 1, 0])
    if needs_pad:
        # Each zero-padded unlabeled row contributes exactly sum(b^2) to the
        # MSE sum (U row = 0, q row = 0) -> subtract analytically.
        mse_sum = mse_sum - (Npad - Bu) * jnp.sum(bf * bf)
    sup_loss = sup_sum / Bx                 # mean over the true labeled batch
    unsup_loss = mse_sum / (Bu * C)         # MSE mean over the true elements
    return sup_loss + lambda_u * unsup_loss


def _reference_loss(X, U, p, q, W, b, *, lambda_u=75.0):
    preds = jnp.concatenate([X, U], axis=0) @ W + b[None, :]
    n = p.shape[0]
    sup = jnp.mean(jnp.sum(-p * jax.nn.log_softmax(preds[:n], axis=1), axis=1))
    mse = jnp.mean((preds[n:] - q) ** 2)
    return sup + lambda_u * mse


if __name__ == "__main__":
    key = jax.random.PRNGKey(0)
    k_x, k_u, k_p, k_q, k_w, k_b = jax.random.split(key, 6)

    # --- 1) tiny ragged f32 case: exercises row-pad fallback + bias correction --
    Bx, Bu, D, C = 4, 4, 32, 8
    X = jax.random.normal(k_x, (Bx, D), dtype=jnp.float32)
    U = jax.random.normal(k_u, (Bu, D), dtype=jnp.float32)
    p = jax.nn.softmax(jax.random.normal(k_p, (Bx, C), dtype=jnp.float32), axis=1)
    q = jax.nn.softmax(jax.random.normal(k_q, (Bu, C), dtype=jnp.float32), axis=1)
    W = jax.random.normal(k_w, (D, C), dtype=jnp.float32) * 0.1
    b = jax.random.normal(k_b, (C,), dtype=jnp.float32) * 0.1   # nonzero bias

    loss = jax.block_until_ready(mixmatch_loss(X, U, p, q, W, b, lambda_u=75.0))
    ref = _reference_loss(X, U, p, q, W, b, lambda_u=75.0)
    assert jnp.allclose(loss, ref, rtol=1e-4, atol=1e-4), (loss, ref)

    # --- 2) bf16 streams, tile divides batch exactly (zero pad copies), T=2 ----
    Bx2 = Bu2 = 64
    X2 = jax.random.normal(k_x, (Bx2, D), dtype=jnp.bfloat16)
    U2 = jax.random.normal(k_u, (Bu2, D), dtype=jnp.bfloat16)
    p2 = jax.nn.softmax(jax.random.normal(k_p, (Bx2, C), dtype=jnp.float32), axis=1)
    q2 = jax.nn.softmax(jax.random.normal(k_q, (Bu2, C), dtype=jnp.float32), axis=1)
    Wb = W.astype(jnp.bfloat16)
    loss2 = jax.block_until_ready(mixmatch_loss(X2, U2, p2, q2, Wb, b))
    ref2 = _reference_loss(X2.astype(jnp.float32), U2.astype(jnp.float32),
                           p2, q2, Wb.astype(jnp.float32), b)
    assert jnp.allclose(loss2, ref2, rtol=5e-3, atol=5e-3), (loss2, ref2)

    # --- 3) K-reduction grid axis (D split into 4 chunks), bf16, T=2 -----------
    Bx3 = Bu3 = 32
    D3 = 1024
    X3 = jax.random.normal(k_x, (Bx3, D3), dtype=jnp.bfloat16)
    U3 = jax.random.normal(k_u, (Bu3, D3), dtype=jnp.bfloat16)
    p3 = jax.nn.softmax(jax.random.normal(k_p, (Bx3, C), dtype=jnp.float32), axis=1)
    q3 = jax.nn.softmax(jax.random.normal(k_q, (Bu3, C), dtype=jnp.float32), axis=1)
    W3 = (jax.random.normal(k_w, (D3, C), dtype=jnp.float32) * 0.03).astype(jnp.bfloat16)
    loss3 = jax.block_until_ready(
        mixmatch_loss(X3, U3, p3, q3, W3, b, tile_k=256))
    ref3 = _reference_loss(X3.astype(jnp.float32), U3.astype(jnp.float32),
                           p3, q3, W3.astype(jnp.float32), b)
    assert jnp.allclose(loss3, ref3, rtol=5e-3, atol=5e-3), (loss3, ref3)

    print("KERNEL_OK")
</pallas_src>

<mosaic_0001>
module attributes {stable_mosaic.version = 11 : i64} {
  func.func @_mixmatch_kernel(%arg0: i32, %arg1: i32, %arg2: memref<16x32xf32, #tpu.memory_space<vmem>>, %arg3: memref<16x32xf32, #tpu.memory_space<vmem>>, %arg4: memref<16x8xf32, #tpu.memory_space<vmem>>, %arg5: memref<16x8xf32, #tpu.memory_space<vmem>>, %arg6: memref<32x128xf32, #tpu.memory_space<vmem>>, %arg7: memref<1x128xf32, #tpu.memory_space<vmem>>, %arg8: memref<1x8x128xf32, #tpu.memory_space<vmem>>, %arg9: memref<16x128xf32, #tpu.memory_space<vmem>>, %arg10: memref<16x128xf32, #tpu.memory_space<vmem>>) attributes {dimension_semantics = [#tpu.dimension_semantics<parallel>, #tpu.dimension_semantics<arbitrary>], iteration_bounds = array<i64: 1, 1>, scalar_prefetch = 0 : i64, scratch_operands = 2 : i64, tpu.core_type = #tpu.core_type<tc>, window_params = [{transform_indices = @transform_0, window_bounds = array<i64: 16, 32>}, {transform_indices = @transform_1, window_bounds = array<i64: 16, 32>}, {transform_indices = @transform_2, window_bounds = array<i64: 16, 8>}, {transform_indices = @transform_3, window_bounds = array<i64: 16, 8>}, {transform_indices = @transform_4, window_bounds = array<i64: 32, 128>}, {pipeline_mode = #tpu.pipeline_mode<synchronous>, transform_indices = @transform_5, window_bounds = array<i64: 1, 128>}, {transform_indices = @transform_6, window_bounds = array<i64: 1, 8, 128>}]} {
    %c0_i32 = arith.constant 0 : i32
    %0 = arith.cmpi eq, %arg1, %c0_i32 : i32
    %1 = arith.extui %0 : i1 to i32
    %c0_i32_0 = arith.constant 0 : i32
    %2 = arith.cmpi ne, %1, %c0_i32_0 : i32
    scf.if %2 {
      %cst_17 = arith.constant 0.000000e+00 : f32
      %17 = vector.broadcast %cst_17 : f32 to vector<16x128xf32>
      %c0_18 = arith.constant 0 : index
      %c0_19 = arith.constant 0 : index
      %18 = vector.load %arg9[%c0_18, %c0_19] : memref<16x128xf32, #tpu.memory_space<vmem>>, vector<16x128xf32>
      tpu.vector_store %arg9[%c0_18, %c0_19], %17 {strides = array<i32>} : memref<16x128xf32, #tpu.memory_space<vmem>>, vector<16x128xf32>,
      %cst_20 = arith.constant 0.000000e+00 : f32
      %19 = vector.broadcast %cst_20 : f32 to vector<16x128xf32>
      %c0_21 = arith.constant 0 : index
      %c0_22 = arith.constant 0 : index
      %20 = vector.load %arg10[%c0_21, %c0_22] : memref<16x128xf32, #tpu.memory_space<vmem>>, vector<16x128xf32>
      tpu.vector_store %arg10[%c0_21, %c0_22], %19 {strides = array<i32>} : memref<16x128xf32, #tpu.memory_space<vmem>>, vector<16x128xf32>,
    } else {
    }
    %c0 = arith.constant 0 : index
    %c0_1 = arith.constant 0 : index
    %3 = vector.load %arg6[%c0, %c0_1] : memref<32x128xf32, #tpu.memory_space<vmem>>, vector<32x128xf32>
    %c0_2 = arith.constant 0 : index
    %c0_3 = arith.constant 0 : index
    %4 = vector.load %arg9[%c0_2, %c0_3] : memref<16x128xf32, #tpu.memory_space<vmem>>, vector<16x128xf32>
    %c0_4 = arith.constant 0 : index
    %c0_5 = arith.constant 0 : index
    %5 = vector.load %arg2[%c0_4, %c0_5] : memref<16x32xf32, #tpu.memory_space<vmem>>, vector<16x32xf32>
    %cst = arith.constant dense<0.000000e+00> : vector<16x128xf32>
    %6 = tpu.matmul %5, %3, %cst {dimension_numbers = #tpu.dot_dimension_numbers<[1], [0], [0], [1], [0, 0, 1, 1], [], []>} : vector<16x32xf32>, vector<32x128xf32>, vector<16x128xf32> -> vector<16x128xf32>
    %7 = arith.addf %4, %6 : vector<16x128xf32>
    %c0_6 = arith.constant 0 : index
    %c0_7 = arith.constant 0 : index
    %8 = vector.load %arg9[%c0_6, %c0_7] : memref<16x128xf32, #tpu.memory_space<vmem>>, vector<16x128xf32>
    tpu.vector_store %arg9[%c0_6, %c0_7], %7 {strides = array<i32>} : memref<16x128xf32, #tpu.memory_space<vmem>>, vector<16x128xf32>,
    %c0_8 = arith.constant 0 : index
    %c0_9 = arith.constant 0 : index
    %9 = vector.load %arg10[%c0_8, %c0_9] : memref<16x128xf32, #tpu.memory_space<vmem>>, vector<16x128xf32>
    %c0_10 = arith.constant 0 : index
    %c0_11 = arith.constant 0 : index
    %10 = vector.load %arg3[%c0_10, %c0_11] : memref<16x32xf32, #tpu.memory_space<vmem>>, vector<16x32xf32>
    %cst_12 = arith.constant dense<0.000000e+00> : vector<16x128xf32>
    %11 = tpu.matmul %10, %3, %cst_12 {dimension_numbers = #tpu.dot_dimension_numbers<[1], [0], [0], [1], [0, 0, 1, 1], [], []>} : vector<16x32xf32>, vector<32x128xf32>, vector<16x128xf32> -> vector<16x128xf32>
    %12 = arith.addf %9, %11 : vector<16x128xf32>
    %c0_13 = arith.constant 0 : index
    %c0_14 = arith.constant 0 : index
    %13 = vector.load %arg10[%c0_13, %c0_14] : memref<16x128xf32, #tpu.memory_space<vmem>>, vector<16x128xf32>
    tpu.vector_store %arg10[%c0_13, %c0_14], %12 {strides = array<i32>} : memref<16x128xf32, #tpu.memory_space<vmem>>, vector<16x128xf32>,
    %c0_i32_15 = arith.constant 0 : i32
    %14 = arith.cmpi eq, %arg1, %c0_i32_15 : i32
    %15 = arith.extui %14 : i1 to i32
    %c0_i32_16 = arith.constant 0 : i32
    %16 = arith.cmpi ne, %15, %c0_i32_16 : i32
    scf.if %16 {
      %c0_17 = arith.constant 0 : index
      %c0_18 = arith.constant 0 : index
      %17 = vector.load %arg7[%c0_17, %c0_18] : memref<1x128xf32, #tpu.memory_space<vmem>>, vector<1x128xf32>
      %c0_19 = arith.constant 0 : index
      %c0_20 = arith.constant 0 : index
      %18 = vector.load %arg9[%c0_19, %c0_20] : memref<16x128xf32, #tpu.memory_space<vmem>>, vector<16x128xf32>
      %19 = vector.broadcast %17 : vector<1x128xf32> to vector<16x128xf32>
      %20 = arith.addf %18, %19 : vector<16x128xf32>
      %cst_21 = arith.constant dense<0xFF800000> : vector<16xf32>
      %21 = vector.multi_reduction <maximumf>, %20, %cst_21 [1] : vector<16x128xf32> to vector<16xf32>
      %22 = vector.shape_cast %21 : vector<16xf32> to vector<16x1xf32>
      %23 = vector.broadcast %22 : vector<16x1xf32> to vector<16x128xf32>
      %24 = arith.subf %20, %23 : vector<16x128xf32>
      %25 = math.exp %24 : vector<16x128xf32>
      %cst_22 = arith.constant dense<0.000000e+00> : vector<16xf32>
      %26 = vector.multi_reduction <add>, %25, %cst_22 [1] : vector<16x128xf32> to vector<16xf32>
      %27 = vector.shape_cast %26 : vector<16xf32> to vector<16x1xf32>
      %28 = math.log %27 : vector<16x1xf32>
      %29 = vector.broadcast %28 : vector<16x1xf32> to vector<16x128xf32>
      %30 = arith.subf %24, %29 : vector<16x128xf32>
      %c0_23 = arith.constant 0 : index
      %c0_24 = arith.constant 0 : index
      %31 = vector.load %arg4[%c0_23, %c0_24] : memref<16x8xf32, #tpu.memory_space<vmem>>, vector<16x8xf32>
      %cst_25 = arith.constant 0.000000e+00 : f32
      %32 = vector.broadcast %cst_25 : f32 to vector<16x8xf32>
      %33 = arith.subf %32, %31 : vector<16x8xf32>
      %34 = vector.extract_strided_slice %30 {offsets = [0, 0], sizes = [16, 8], strides = [1, 1]} : vector<16x128xf32> to vector<16x8xf32>
      %35 = arith.mulf %33, %34 : vector<16x8xf32>
      %36 = vector.shape_cast %35 : vector<16x8xf32> to vector<1x16x8xf32>
      %cst_26 = arith.constant dense<0.000000e+00> : vector<1xf32>
      %37 = vector.multi_reduction <add>, %36, %cst_26 [1, 2] : vector<1x16x8xf32> to vector<1xf32>
      %38 = vector.shape_cast %37 : vector<1xf32> to vector<1x1x1xf32>
      %39 = vector.extract %38[0, 0, 0] : f32 from vector<1x1x1xf32>
      %c0_27 = arith.constant 0 : index
      %c0_28 = arith.constant 0 : index
      %40 = vector.load %arg10[%c0_27, %c0_28] : memref<16x128xf32, #tpu.memory_space<vmem>>, vector<16x128xf32>
      %41 = vector.extract_strided_slice %40 {offsets = [0, 0], sizes = [16, 8], strides = [1, 1]} : vector<16x128xf32> to vector<16x8xf32>
      %42 = vector.extract_strided_slice %17 {offsets = [0, 0], sizes = [1, 8], strides = [1, 1]} : vector<1x128xf32> to vector<1x8xf32>
      %43 = vector.broadcast %42 : vector<1x8xf32> to vector<16x8xf32>
      %44 = arith.addf %41, %43 : vector<16x8xf32>
      %c0_29 = arith.constant 0 : index
      %c0_30 = arith.constant 0 : index
      %45 = vector.load %arg5[%c0_29, %c0_30] : memref<16x8xf32, #tpu.memory_space<vmem>>, vector<16x8xf32>
      %46 = arith.subf %44, %45 : vector<16x8xf32>
      %47 = arith.mulf %46, %46 : vector<16x8xf32>
      %48 = vector.shape_cast %47 : vector<16x8xf32> to vector<1x16x8xf32>
      %cst_31 = arith.constant dense<0.000000e+00> : vector<1xf32>
      %49 = vector.multi_reduction <add>, %48, %cst_31 [1, 2] : vector<1x16x8xf32> to vector<1xf32>
      %50 = vector.shape_cast %49 : vector<1xf32> to vector<1x1x1xf32>
      %51 = vector.extract %50[0, 0, 0] : f32 from vector<1x1x1xf32>
      %52 = tpu.iota {dimensions = array<i32: 1>} : vector<1x8x128xi32>
      %c0_i32_32 = arith.constant 0 : i32
      %53 = vector.broadcast %c0_i32_32 : i32 to vector<1x8x128xi32>
      %54 = arith.cmpi eq, %52, %53 : vector<1x8x128xi32>
      %c1_i32 = arith.constant 1 : i32
      %55 = vector.broadcast %c1_i32 : i32 to vector<1x8x128xi32>
      %56 = arith.cmpi eq, %52, %55 : vector<1x8x128xi32>
      %cst_33 = arith.constant 0.000000e+00 : f32
      %57 = vector.broadcast %51 : f32 to vector<1x8x128xf32>
      %58 = vector.broadcast %cst_33 : f32 to vector<1x8x128xf32>
      %59 = arith.select %56, %57, %58 : vector<1x8x128xi1>, vector<1x8x128xf32>
      %60 = vector.broadcast %39 : f32 to vector<1x8x128xf32>
      %61 = arith.select %54, %60, %59 : vector<1x8x128xi1>, vector<1x8x128xf32>
      %c0_34 = arith.constant 0 : index
      %c0_35 = arith.constant 0 : index
      %c0_36 = arith.constant 0 : index
      %62 = vector.load %arg8[%c0_34, %c0_35, %c0_36] : memref<1x8x128xf32, #tpu.memory_space<vmem>>, vector<1x8x128xf32>
      tpu.vector_store %arg8[%c0_34, %c0_35, %c0_36], %61 {strides = array<i32>} : memref<1x8x128xf32, #tpu.memory_space<vmem>>, vector<1x8x128xf32>,
    } else {
    }
    return
  }
  func.func @transform_0(%arg0: i32, %arg1: i32) -> (i32, i32) {
    %c0_i32 = arith.constant 0 : i32
    return %arg0, %arg1 : i32, i32
  }
  func.func @transform_1(%arg0: i32, %arg1: i32) -> (i32, i32) {
    %c0_i32 = arith.constant 0 : i32
    return %arg0, %arg1 : i32, i32
  }
  func.func @transform_2(%arg0: i32, %arg1: i32) -> (i32, i32) {
    %c0_i32 = arith.constant 0 : i32
    %c0_i32_0 = arith.constant 0 : i32
    return %arg0, %c0_i32 : i32, i32
  }
  func.func @transform_3(%arg0: i32, %arg1: i32) -> (i32, i32) {
    %c0_i32 = arith.constant 0 : i32
    %c0_i32_0 = arith.constant 0 : i32
    return %arg0, %c0_i32 : i32, i32
  }
  func.func @transform_4(%arg0: i32, %arg1: i32) -> (i32, i32) {
    %c0_i32 = arith.constant 0 : i32
    %c0_i32_0 = arith.constant 0 : i32
    return %arg1, %c0_i32 : i32, i32
  }
  func.func @transform_5(%arg0: i32, %arg1: i32) -> (i32, i32) {
    %c0_i32 = arith.constant 0 : i32
    %c0_i32_0 = arith.constant 0 : i32
    %c0_i32_1 = arith.constant 0 : i32
    return %c0_i32, %c0_i32_0 : i32, i32
  }
  func.func @transform_6(%arg0: i32, %arg1: i32) -> (i32, i32, i32) {
    %c0_i32 = arith.constant 0 : i32
    %c0_i32_0 = arith.constant 0 : i32
    %c0_i32_1 = arith.constant 0 : i32
    return %arg0, %c0_i32, %c0_i32_0 : i32, i32, i32
  }
}

</mosaic_0001>

<llo_original>
// kernel: tpu_custom_call.1
$region0: #{tpu_custom_call.1}
  #allocation0 [shape = 'u32[]', space=smem, size = 0x4, offset = 0x4, fixed_abs, tag = 'smem constant byte address 0x4 - core index']
  #allocation1 [shape = 'u32[144,128]{1,0:T(1,128)}', space=vmem, size = 0x12000, scoped, tag = 'internal scratch']
  #allocation2 [shape = 'f32[16,128]{1,0:T(8,128)}', space=vmem, size = 0x2000, scoped, tag = 'scratch operand']
  #allocation3 [shape = 'f32[16,128]{1,0:T(8,128)}', space=vmem, size = 0x2000, scoped, tag = 'scratch operand']
  %s0 = inlined_call_operand.vmem [shape: f32[16,32], index: 0, kind: input, shape index: {}]
  %s1 = inlined_call_operand.hbm [shape: f32[16,32], index: 1, kind: input, shape index: {}]
  %s2 = inlined_call_operand.vmem [shape: f32[16,8], index: 2, kind: input, shape index: {}]
  %s3 = inlined_call_operand.vmem [shape: f32[16,8], index: 3, kind: input, shape index: {}]
  %s4 = inlined_call_operand.vmem [shape: f32[32,128], index: 4, kind: input, shape index: {}]
  %s5 = inlined_call_operand.vmem [shape: f32[1,128], index: 5, kind: input, shape index: {}]
  %s6 = inlined_call_operand.hbm [shape: f32[1,8,128], index: 6, kind: output, shape index: {}]
  %s7 = sld [smem:[#allocation0]]
  $region46: #{tpu_custom_call.1} parent=0
    _
  %s9 = ssub.s32 1, %s7
  %s10 = scalar_select 0, %s9, %s7
  $region1: #{tpu_custom_call.1} parent=0
    #allocation4 [shape = 'u8[8192]{0}', space=vmem, size = 0x2000, scoped, tag = 'input window, operand 1, single buffered']
    #allocation5 [shape = 's32[1]{0}', space=sflag, size = 0x4, scoped, tag = 'scoped memory for tpu_custom_call.1']
    #allocation6 [shape = 's32[1]{0}', space=sflag, size = 0x4, scoped, tag = 'scoped memory for tpu_custom_call.1']
    #allocation7 [shape = 'u8[4096]{0}', space=vmem, size = 0x1000, scoped, tag = 'output window, operand 0, single buffered']
    %11 = vsyncpa [#allocation5], 0
    %12 = vsyncpa [#allocation6], 0
    // Predicated region
    $region2: #{tpu_custom_call.1} parent=1 // pred_check
      _
    $region3: #{tpu_custom_call.1} parent=1 // pred_check_branch
      %14 = sbr.rel (0) target = $region5
    $region4: #{tpu_custom_call.1} parent=1 // pred_region
      _
    $region5: #{tpu_custom_call.1} parent=1 // pred_fallthru
      _
    // Predicated region
    $region6: #{tpu_custom_call.1} parent=1 // pred_check
      _
    $region7: #{tpu_custom_call.1} parent=1 // pred_check_branch
      %16 = sbr.rel (0) target = $region9
    $region8: #{tpu_custom_call.1} parent=1 // pred_region
      %s18 = ssub.s32 256, 256
      %19 = vsyncadd [#allocation5], %s18
      %s20 = sshll.u32 [#allocation4], 4
      %s21 = int_to_ptr.vmem [resolvable:$true] %s20
      %26 = dma.hbm_to_vmem [thread:$0]  %s1, 256, %s21, [#allocation5], 128, 128, 8
    $region9: #{tpu_custom_call.1} parent=1 // pred_fallthru
      _
    // Predicated region
    $region10: #{tpu_custom_call.1} parent=1 // pred_check
      _
    $region11: #{tpu_custom_call.1} parent=1 // pred_check_branch
      %28 = sbr.rel (0) target = $region13
    $region12: #{tpu_custom_call.1} parent=1 // pred_region
      _
    $region13: #{tpu_custom_call.1} parent=1 // pred_fallthru
      _
    // Predicated region
    $region14: #{tpu_custom_call.1} parent=1 // pred_check
      _
    $region15: #{tpu_custom_call.1} parent=1 // pred_check_branch
      %30 = sbr.rel (0) target = $region17
    $region16: #{tpu_custom_call.1} parent=1 // pred_region
      _
    $region17: #{tpu_custom_call.1} parent=1 // pred_fallthru
      _
    // Predicated region
    $region18: #{tpu_custom_call.1} parent=1 // pred_check
      _
    $region19: #{tpu_custom_call.1} parent=1 // pred_check_branch
      %32 = sbr.rel (0) target = $region21
    $region20: #{tpu_custom_call.1} parent=1 // pred_region
      _
    $region21: #{tpu_custom_call.1} parent=1 // pred_fallthru
      _
    // Predicated region
    $region22: #{tpu_custom_call.1} parent=1 // pred_check
      _
    $region23: #{tpu_custom_call.1} parent=1 // pred_check_branch
      %34 = sbr.rel (0) target = $region25
    $region24: #{tpu_custom_call.1} parent=1 // pred_region
      _
    $region25: #{tpu_custom_call.1} parent=1 // pred_fallthru
      _
    // Predicated region
    $region26: #{tpu_custom_call.1} parent=1 // pred_check
      _
    $region27: #{tpu_custom_call.1} parent=1 // pred_check_branch
      %36 = sbr.rel (0) target = $region29
    $region28: #{tpu_custom_call.1} parent=1 // pred_region
      %37 = dma.done [#allocation5], 256
    $region29: #{tpu_custom_call.1} parent=1 // pred_fallthru
      _
    %p38 = scmp.eq.s32.totalorder 0, 0
    // Predicated region
    $region30: #{tpu_custom_call.1} parent=1 // pred_check
      %p39 = pneg %p38
    $region31: #{tpu_custom_call.1} parent=1 // pred_check_branch
      %41 = sbr.rel (%p39) target = $region33
    $region32: #{tpu_custom_call.1} parent=1 // pred_region
      %42 = vst [vmem:[#allocation2] sm:$0xff] 0.0
      %43 = vst [vmem:[#allocation2 + $0x8] sm:$0xff] 0.0
      %44 = vst [vmem:[#allocation3] sm:$0xff] 0.0
      %45 = vst [vmem:[#allocation3 + $0x8] sm:$0xff] 0.0
    $region33: #{tpu_custom_call.1} parent=1 // pred_fallthru
      _
    %v46 = vld [vmem:[%s4] sm:$0xff]
    %v47 = vld [vmem:[%s4 + $0x8] sm:$0xff]
    %v48 = vld [vmem:[%s4 + $0x10] sm:$0xff]
    %v49 = vld [vmem:[%s4 + $0x18] sm:$0xff]
    %v50 = vld [vmem:[#allocation2] sm:$0xff]
    %v51 = vld [vmem:[#allocation2 + $0x8] sm:$0xff]
    %v52 = vld [vmem:[%s0] sm:$0xff]
    %v53 = vld [vmem:[%s0 + $0x8] sm:$0xff]
    %vm54 = vcmask 261120
    %v56 = vsel %vm54, %v52, 0
    %v59 = vsel %vm54, %v53, 0
    %61 = vmatprep.subr.mxu0 0.0
    %62 = vmatpush1.msra.mxu0 %v46
    %63 = vmatprep.subr.mxu0 0.0
    %64 = vmatpush1.msra.mxu0 %v47
    %65 = vmatprep.subr.mxu0 0.0
    %66 = vmatpush1.msra.mxu0 %v48
    %67 = vmatprep.subr.mxu0 0.0
    %68 = vmatpush1.msra.mxu0 %v49
    %69 = vmatprep.subr.mxu0 0.0
    %70 = vmatpush1.msra.mxu0 0.0
    %71 = vmatprep.subr.mxu0 0.0
    %72 = vmatpush1.msra.mxu0 0.0
    %73 = vmatprep.subr.mxu0 0.0
    %74 = vmatpush1.msra.mxu0 0.0
    %75 = vmatprep.subr.mxu0 0.0
    %76 = vmatpush1.msra.mxu0 0.0
    %77 = vmatprep.subr.mxu0 0.0
    %78 = vmatpush1.msra.mxu0 0.0
    %79 = vmatprep.subr.mxu0 0.0
    %80 = vmatpush1.msra.mxu0 0.0
    %81 = vmatprep.subr.mxu0 0.0
    %82 = vmatpush1.msra.mxu0 0.0
    %83 = vmatprep.subr.mxu0 0.0
    %84 = vmatpush1.msra.mxu0 0.0
    %85 = vmatprep.subr.mxu0 0.0
    %86 = vmatpush1.msra.mxu0 0.0
    %87 = vmatprep.subr.mxu0 0.0
    %88 = vmatpush1.msra.mxu0 0.0
    %89 = vmatprep.subr.mxu0 0.0
    %90 = vmatpush1.msra.mxu0 0.0
    %91 = vmatprep.subr.mxu0 0.0
    %92 = vmatpush1.msra.mxu0 0.0
    %93 = vmatprep.subr.mxu0 0.0
    %94 = vmatpush1.msra.mxu0 0.0
    %95 = vmatprep.subr.mxu0 0.0
    %96 = vmatpush1.msra.mxu0 0.0
    %97 = vmatprep.subr.mxu0 0.0
    %98 = vmatpush1.msra.mxu0 0.0
    %99 = vmatprep.subr.mxu0 0.0
    %100 = vmatpush1.msra.mxu0 0.0
    %101 = vmatprep.subr.mxu0 0.0
    %102 = vmatpush1.msra.mxu0 0.0
    %103 = vmatprep.subr.mxu0 0.0
    %104 = vmatpush1.msra.mxu0 0.0
    %105 = vmatprep.subr.mxu0 0.0
    %106 = vmatpush1.msra.mxu0 0.0
    %107 = vmatprep.subr.mxu0 0.0
    %108 = vmatpush1.msra.mxu0 0.0
    %109 = vmatprep.subr.mxu0 0.0
    %110 = vmatpush1.msra.mxu0 0.0
    %111 = vmatprep.subr.mxu0 0.0
    %112 = vmatpush1.msra.mxu0 0.0
    %113 = vmatprep.subr.mxu0 0.0
    %114 = vmatpush1.msra.mxu0 0.0
    %115 = vmatprep.subr.mxu0 0.0
    %116 = vmatpush1.msra.mxu0 0.0
    %117 = vmatprep.subr.mxu0 0.0
    %118 = vmatpush1.msra.mxu0 0.0
    %119 = vmatprep.subr.mxu0 0.0
    %120 = vmatpush1.msra.mxu0 0.0
    %121 = vmatprep.subr.mxu0 0.0
    %122 = vmatpush1.msra.mxu0 0.0
    %123 = vmatprep.subr.mxu0 0.0
    %124 = vmatpush1.msra.mxu0 0.0
    %125 = vmatprep.mubr.f32.mxu0 0.0
    %126 = vmatmul.mubr.f32.gmra.mrb[0].mxu0 %v56
    %v127 = vpop.f32.mrb[0].mxu0
    %v128 = vadd.f32 0.0, %v127
    %v129 = vpop.f32.mrb[0].mxu0
    %130 = vmatprep.mubr.f32.mxu0 0.0
    %131 = vmatmul.mubr.f32.gmra.mrb[0].mxu0 %v59
    %v132 = vpop.f32.mrb[0].mxu0
    %v133 = vadd.f32 0.0, %v132
    %v134 = vpop.f32.mrb[0].mxu0
    %135 = vdwg.mxu0
    %v136 = vadd.f32 %v50, %v128
    %v137 = vadd.f32 %v51, %v133
    %138 = vst [vmem:[#allocation2] sm:$0xff] %v136
    %139 = vst [vmem:[#allocation2 + $0x8] sm:$0xff] %v137
    %v140 = vld [vmem:[#allocation3] sm:$0xff]
    %v141 = vld [vmem:[#allocation3 + $0x8] sm:$0xff]
    %v142 = vld [vmem:[#allocation4] sm:$0xff]
    %v143 = vld [vmem:[#allocation4 + $0x8] sm:$0xff]
    %v145 = vsel %vm54, %v142, 0
    %v148 = vsel %vm54, %v143, 0
    %150 = vmatprep.subr.mxu0 0.0
    %151 = vmatpush1.msra.mxu0 %v46
    %152 = vmatprep.subr.mxu0 0.0
    %153 = vmatpush1.msra.mxu0 %v47
    %154 = vmatprep.subr.mxu0 0.0
    %155 = vmatpush1.msra.mxu0 %v48
    %156 = vmatprep.subr.mxu0 0.0
    %157 = vmatpush1.msra.mxu0 %v49
    %158 = vmatprep.subr.mxu0 0.0
    %159 = vmatpush1.msra.mxu0 0.0
    %160 = vmatprep.subr.mxu0 0.0
    %161 = vmatpush1.msra.mxu0 0.0
    %162 = vmatprep.subr.mxu0 0.0
    %163 = vmatpush1.msra.mxu0 0.0
    %164 = vmatprep.subr.mxu0 0.0
    %165 = vmatpush1.msra.mxu0 0.0
    %166 = vmatprep.subr.mxu0 0.0
    %167 = vmatpush1.msra.mxu0 0.0
    %168 = vmatprep.subr.mxu0 0.0
    %169 = vmatpush1.msra.mxu0 0.0
    %170 = vmatprep.subr.mxu0 0.0
    %171 = vmatpush1.msra.mxu0 0.0
    %172 = vmatprep.subr.mxu0 0.0
    %173 = vmatpush1.msra.mxu0 0.0
    %174 = vmatprep.subr.mxu0 0.0
    %175 = vmatpush1.msra.mxu0 0.0
    %176 = vmatprep.subr.mxu0 0.0
    %177 = vmatpush1.msra.mxu0 0.0
    %178 = vmatprep.subr.mxu0 0.0
    %179 = vmatpush1.msra.mxu0 0.0
    %180 = vmatprep.subr.mxu0 0.0
    %181 = vmatpush1.msra.mxu0 0.0
    %182 = vmatprep.subr.mxu0 0.0
    %183 = vmatpush1.msra.mxu0 0.0
    %184 = vmatprep.subr.mxu0 0.0
    %185 = vmatpush1.msra.mxu0 0.0
    %186 = vmatprep.subr.mxu0 0.0
    %187 = vmatpush1.msra.mxu0 0.0
    %188 = vmatprep.subr.mxu0 0.0
    %189 = vmatpush1.msra.mxu0 0.0
    %190 = vmatprep.subr.mxu0 0.0
    %191 = vmatpush1.msra.mxu0 0.0
    %192 = vmatprep.subr.mxu0 0.0
    %193 = vmatpush1.msra.mxu0 0.0
    %194 = vmatprep.subr.mxu0 0.0
    %195 = vmatpush1.msra.mxu0 0.0
    %196 = vmatprep.subr.mxu0 0.0
    %197 = vmatpush1.msra.mxu0 0.0
    %198 = vmatprep.subr.mxu0 0.0
    %199 = vmatpush1.msra.mxu0 0.0
    %200 = vmatprep.subr.mxu0 0.0
    %201 = vmatpush1.msra.mxu0 0.0
    %202 = vmatprep.subr.mxu0 0.0
    %203 = vmatpush1.msra.mxu0 0.0
    %204 = vmatprep.subr.mxu0 0.0
    %205 = vmatpush1.msra.mxu0 0.0
    %206 = vmatprep.subr.mxu0 0.0
    %207 = vmatpush1.msra.mxu0 0.0
    %208 = vmatprep.subr.mxu0 0.0
    %209 = vmatpush1.msra.mxu0 0.0
    %210 = vmatprep.subr.mxu0 0.0
    %211 = vmatpush1.msra.mxu0 0.0
    %212 = vmatprep.subr.mxu0 0.0
    %213 = vmatpush1.msra.mxu0 0.0
    %214 = vmatprep.mubr.f32.mxu0 0.0
    %215 = vmatmul.mubr.f32.gmra.mrb[0].mxu0 %v145
    %v216 = vpop.f32.mrb[0].mxu0
    %v217 = vadd.f32 0.0, %v216
    %v218 = vpop.f32.mrb[0].mxu0
    %219 = vmatprep.mubr.f32.mxu0 0.0
    %220 = vmatmul.mubr.f32.gmra.mrb[0].mxu0 %v148
    %v221 = vpop.f32.mrb[0].mxu0
    %v222 = vadd.f32 0.0, %v221
    %v223 = vpop.f32.mrb[0].mxu0
    %224 = vdwg.mxu0
    %v225 = vadd.f32 %v140, %v217
    %v226 = vadd.f32 %v141, %v222
    %227 = vst [vmem:[#allocation3] sm:$0xff] %v225
    %228 = vst [vmem:[#allocation3 + $0x8] sm:$0xff] %v226
    // Predicated region
    $region34: #{tpu_custom_call.1} parent=1 // pred_check
      %p229 = pneg %p38
    $region35: #{tpu_custom_call.1} parent=1 // pred_check_branch
      %231 = sbr.rel (%p229) target = $region37
    $region36: #{tpu_custom_call.1} parent=1 // pred_region
      %v232 = vld [vmem:[%s5] sm:$0x1]
      %v233 = vld [vmem:[#allocation2] sm:$0xff]
      %v234 = vld [vmem:[#allocation2 + $0x8] sm:$0xff]
      %v236 = vlaneseq
      %v237 = vshrl.u32 %v236, 7
      %v238 = vsub.s32 0, %v237
      %v239 = vrot.slane %v232, %v238
      %v241 = vadd.f32 %v233, %v239
      %v242 = vadd.f32 %v234, %v239
      %243 = vmax.xlane.f32.xlu0 %v241
      %v244 = vpop.xlane.xlu0 %243
      %245 = vmax.xlane.f32.xlu0 %v242
      %v246 = vpop.xlane.xlu0 %245
      %v247 = vsub.f32 %v241, %v244
      %v248 = vsub.f32 %v242, %v246
      %v249 = vmul.f32 %v247, 1.442695
      %v250 = vpow.pop %v249
      %v251 = vmul.f32 %v248, 1.442695
      %v252 = vpow.pop %v251
      %253 = vadd.xlane.f32.xlu0 %v250
      %v254 = vpop.xlane.xlu0 %253
      %255 = vadd.xlane.f32.xlu0 %v252
      %v256 = vpop.xlane.xlu0 %255
      %v257 = vlog2.pop %v254
      %v258 = vmul.f32 %v257, 0.6931472
      %v259 = vlog2.pop %v256
      %v260 = vmul.f32 %v259, 0.6931472
      %v261 = vsub.f32 %v247, %v258
      %v262 = vsub.f32 %v248, %v260
      %v263 = vld [vmem:[%s2] sm:$0xff]
      %v264 = vld [vmem:[%s2 + $0x8] sm:$0xff]
      %v265 = vsub.f32 0.0, %v263
      %v266 = vsub.f32 0.0, %v264
      %v267 = vmul.f32 %v265, %v261
      %v268 = vmul.f32 %v266, %v262
      %vm269 = vcmask 64512
      %v270 = vsel %vm269, %v267, 0.0
      %v271 = vsel %vm269, %v268, 0.0
      %v272 = vadd.f32 %v270, %v271
      %273 = vadd.xlane.f32.xlu0 %v272
      %v274 = vpop.xlane.xlu0 %273
      %v275 = vrot.slane %v274, 4
      %v276 = vadd.f32 %v274, %v275
      %v277 = vrot.slane %v276, 2
      %v278 = vadd.f32 %v276, %v277
      %v279 = vrot.slane %v278, 1
      %v280 = vadd.f32 %v278, %v279
      %s281 = vtos %v280
      %v282 = vld [vmem:[#allocation3] sm:$0xff]
      %v283 = vld [vmem:[#allocation3 + $0x8] sm:$0xff]
      %v284 = vadd.f32 %v282, %v239
      %v285 = vadd.f32 %v283, %v239
      %v286 = vld [vmem:[%s3] sm:$0xff]
      %v287 = vld [vmem:[%s3 + $0x8] sm:$0xff]
      %v288 = vsub.f32 %v284, %v286
      %v289 = vsub.f32 %v285, %v287
      %v290 = vmul.f32 %v288, %v288
      %v291 = vmul.f32 %v289, %v289
      %v292 = vsel %vm269, %v290, 0.0
      %v293 = vsel %vm269, %v291, 0.0
      %v294 = vadd.f32 %v292, %v293
      %295 = vadd.xlane.f32.xlu0 %v294
      %v296 = vpop.xlane.xlu0 %295
      %v297 = vrot.slane %v296, 4
      %v298 = vadd.f32 %v296, %v297
      %v299 = vrot.slane %v298, 2
      %v300 = vadd.f32 %v298, %v299
      %v301 = vrot.slane %v300, 1
      %v302 = vadd.f32 %v300, %v301
      %s303 = vtos %v302
      %v304 = vlaneseq
      %v305 = vshrl.u32 %v304, 7
      %vm306 = vcmp.eq.s32.totalorder %v305, 0
      %vm307 = vcmp.eq.s32.totalorder %v305, 1
      %v308 = vstv %s303
      %v309 = vsel %vm307, %v308, 0.0
      %v310 = vstv %s281
      %v311 = vsel %vm306, %v310, %v309
      %312 = vst [vmem:[#allocation7] sm:$0xff] %v311
    $region37: #{tpu_custom_call.1} parent=1 // pred_fallthru
      _
    // Predicated region
    $region38: #{tpu_custom_call.1} parent=1 // pred_check
      _
    $region39: #{tpu_custom_call.1} parent=1 // pred_check_branch
      %314 = sbr.rel (0) target = $region41
    $region40: #{tpu_custom_call.1} parent=1 // pred_region
      %s316 = ssub.s32 128, 128
      %317 = vsyncadd [#allocation6], %s316
      %s319 = sshll.u32 [#allocation7], 4
      %s320 = int_to_ptr.vmem [resolvable:$true] %s319
      %322 = dma.vmem_to_hbm [thread:$0]  %s320, 128, %s6, [#allocation6]
    $region41: #{tpu_custom_call.1} parent=1 // pred_fallthru
      _
    // Predicated region
    $region42: #{tpu_custom_call.1} parent=1 // pred_check
      _
    $region43: #{tpu_custom_call.1} parent=1 // pred_check_branch
      %324 = sbr.rel (0) target = $region45
    $region44: #{tpu_custom_call.1} parent=1 // pred_region
      %325 = dma.done [#allocation6], 128
    $region45: #{tpu_custom_call.1} parent=1 // pred_fallthru
      _
    %326 = vsyncpa [#allocation5], 1
    %327 = vsyncpa [#allocation6], 1

</llo_original>
